<compile_context>
chip_gen: v5e
topology: v5e:2x2
jax: 0.10.0
libtpu: 0.0.40
codegen_flags: <defaults>
</compile_context>

<pallas_src>
import math
from functools import partial

import jax
import jax.numpy as jnp
from jax.experimental import pallas as pl
from jax.experimental.pallas import tpu as pltpu


def _biasfree_ln_kernel_simple(x_ref, w_ref, o_ref, *, c):
    """C % 128 == 0 (or degenerate fallback): one logical row per physical row."""
    x = x_ref[...].astype(jnp.float32)            # (T, C)
    w = w_ref[...].astype(jnp.float32)            # (1, C) -> broadcasts over rows
    inv_c = jnp.float32(1.0 / c)
    mu = jnp.sum(x, axis=-1, keepdims=True) * inv_c
    ex2 = jnp.sum(x * x, axis=-1, keepdims=True) * inv_c
    var = jnp.maximum(ex2 - mu * mu, 0.0)         # biased variance (unbiased=False)
    inv = jax.lax.rsqrt(var + 1e-5)
    o_ref[...] = (x * inv * w).astype(o_ref.dtype)


def _biasfree_ln_kernel_packed(x_ref, w_ref, s_ref, st_ref, o_ref, *, c):
    """Lane-dense packed path: each physical row holds g logical rows of width c.

    Per-segment sums are computed on the MXU via a constant (g*c, g) 0/1 selector matrix;
    the per-logical-row inverse std (T, g) is expanded back to (T, g*c) with the transposed
    selector.  All matmuls are f32 / HIGHEST precision.
    """
    x = x_ref[...].astype(jnp.float32)            # (T, g*c)
    w = w_ref[...].astype(jnp.float32)            # (1, g*c)
    s = s_ref[...]                                # (g*c, g) f32 selector
    st = st_ref[...]                              # (g, g*c) f32 selector^T
    hi = jax.lax.Precision.HIGHEST
    inv_c = jnp.float32(1.0 / c)

    seg_sum = jnp.dot(x, s, preferred_element_type=jnp.float32, precision=hi)      # (T, g)
    seg_sq = jnp.dot(x * x, s, preferred_element_type=jnp.float32, precision=hi)   # (T, g)
    mu = seg_sum * inv_c
    var = jnp.maximum(seg_sq * inv_c - mu * mu, 0.0)
    inv = jax.lax.rsqrt(var + 1e-5)               # (T, g)
    inv_full = jnp.dot(inv, st, preferred_element_type=jnp.float32, precision=hi)  # (T, g*c)
    o_ref[...] = (x * inv_full * w).astype(o_ref.dtype)


def _round_up(v, m):
    return -(-v // m) * m


def biasfree_layernorm(x, weight, *, target_block_elems=2 * 1024 * 1024,
                       min_block_elems=256 * 1024, max_pack=128):
    """BiasFree LayerNorm over the last dim. x: (..., C), weight: (C,)."""
    orig_shape = x.shape
    C = orig_shape[-1]
    assert weight.shape == (C,)

    rows = math.prod(orig_shape[:-1])
    x2d = x.reshape(rows, C)

    # ---- lane-dense packing --------------------------------------------------------------
    if C % 128 == 0:
        g = 1
    else:
        g = 128 // math.gcd(C, 128)               # smallest g with (g*C) % 128 == 0
        if g > max_pack or rows < g:
            g = 1                                 # degenerate tiny input: lane-sparse fallback

    pad_rows = 0
    if g > 1:
        pad_rows = (-rows) % g                    # pad a few rows instead of lane-sparse blocks
        if pad_rows:
            x2d = jnp.pad(x2d, ((0, pad_rows), (0, 0)))
        xp = x2d.reshape((rows + pad_rows) // g, g * C)   # row-major, metadata-only reshape
        wp = jnp.tile(weight, g).reshape(1, g * C)
    else:
        xp = x2d
        wp = weight.reshape(1, C)

    rows_p, width = xp.shape

    # ---- row-tile sizing -----------------------------------------------------------------
    itemsize = jnp.dtype(x.dtype).itemsize
    sub = max(8, 32 // itemsize)                  # sublane packing: 8 f32 / 16 bf16 / 32 int8

    tile_rows = max(sub, (target_block_elems // width) // sub * sub)

    # Keep >= 4 grid steps (pipelining + even v7x 2-TC split) while blocks stay >= ~1 MiB.
    min_rows = max(sub, (min_block_elems // width) // sub * sub)
    rows_per_4 = _round_up(pl.cdiv(rows_p, 4), sub)
    tile_rows = min(tile_rows, max(rows_per_4, min_rows))
    if tile_rows >= rows_p:
        tile_rows = rows_p                        # small input: single full-extent block

    # ---- VMEM budget (shrink tile until it fits the per-generation ceiling) ---------------
    try:
        vmem_cap = int(getattr(pltpu.get_tpu_info(), "vmem_capacity_bytes", 128 << 20))
    except Exception:
        vmem_cap = 128 << 20
    vmem_ceiling = min(96 << 20, (vmem_cap * 3) // 4)   # ~96 MiB on 128 MiB parts, 48 MiB on v7x

    def _budget(tr):
        # 2x double-buffered in + out blocks (I/O dtype) + ~4 block-sized f32 intermediates
        # + slack for resident weight / selectors / misc scratch.
        return 4 * tr * width * itemsize + 4 * tr * width * 4 + (2 << 20)

    while _budget(tile_rows) > vmem_ceiling and tile_rows > sub:
        tile_rows = max(sub, (tile_rows // 2) // sub * sub)

    grid_n = pl.cdiv(rows_p, tile_rows)
    # Best-effort even grid so both v7x TensorCores get equal work.
    if grid_n > 1 and grid_n % 2 == 1:
        tile_alt = max(sub, _round_up(pl.cdiv(rows_p, grid_n + 1), sub))
        if tile_alt >= min(min_rows, tile_rows):
            tile_rows = min(tile_rows, tile_alt)
            grid_n = pl.cdiv(rows_p, tile_rows)

    vmem_limit = int(min(vmem_ceiling, max(_budget(tile_rows), 32 << 20)))

    # ---- pallas_call ----------------------------------------------------------------------
    x_spec = pl.BlockSpec((tile_rows, width), lambda i: (i, 0))
    w_spec = pl.BlockSpec((1, width), lambda i: (0, 0))          # constant map -> resident
    o_spec = pl.BlockSpec((tile_rows, width), lambda i: (i, 0))
    compiler_params = pltpu.CompilerParams(
        dimension_semantics=("parallel",),
        vmem_limit_bytes=vmem_limit,
    )
    out_shape = jax.ShapeDtypeStruct((rows_p, width), x.dtype)

    if g == 1:
        out2d = pl.pallas_call(
            partial(_biasfree_ln_kernel_simple, c=C),
            out_shape=out_shape,
            grid_spec=pltpu.PrefetchScalarGridSpec(
                num_scalar_prefetch=0,
                grid=(grid_n,),
                in_specs=[x_spec, w_spec],
                out_specs=o_spec,
            ),
            compiler_params=compiler_params,
        )(xp, wp)
    else:
        lane_seg = jnp.arange(width, dtype=jnp.int32) // C        # lane -> logical-row segment
        seg_ids = jnp.arange(g, dtype=jnp.int32)
        sel = (lane_seg[:, None] == seg_ids[None, :]).astype(jnp.float32)    # (width, g)
        sel_t = (seg_ids[:, None] == lane_seg[None, :]).astype(jnp.float32)  # (g, width)
        out2d = pl.pallas_call(
            partial(_biasfree_ln_kernel_packed, c=C),
            out_shape=out_shape,
            grid_spec=pltpu.PrefetchScalarGridSpec(
                num_scalar_prefetch=0,
                grid=(grid_n,),
                in_specs=[
                    x_spec,
                    w_spec,
                    pl.BlockSpec((width, g), lambda i: (0, 0)),   # selector, resident
                    pl.BlockSpec((g, width), lambda i: (0, 0)),   # selector^T, resident
                ],
                out_specs=o_spec,
            ),
            compiler_params=compiler_params,
        )(xp, wp, sel, sel_t)

    if g > 1:
        out2d = out2d.reshape(rows + pad_rows, C)
        if pad_rows:
            out2d = out2d[:rows]
    return out2d.reshape(orig_shape)


def _reference(x, weight):
    mu = jnp.mean(x, axis=-1, keepdims=True)
    sigma = jnp.mean((x - mu) ** 2, axis=-1, keepdims=True)
    return x / jnp.sqrt(sigma + 1e-5) * weight


if __name__ == "__main__":
    key = jax.random.PRNGKey(0)
    k0, k1, k2, k3 = jax.random.split(key, 4)

    # Primary case from the module: normalize over hidden=32, x of shape (batch=2, seq=8, 32).
    # C=32 -> lane-dense packed path (g=4), MXU selector reductions.
    B, N, C = 2, 8, 32
    x = jax.random.normal(k0, (B, N, C), dtype=jnp.float32)
    weight = jnp.ones((C,), dtype=jnp.float32)    # init exactly as in the PyTorch module
    out = jax.block_until_ready(biasfree_layernorm(x, weight))
    assert jnp.allclose(out, _reference(x, weight), atol=1e-5, rtol=1e-5), "mismatch (packed)"

    # C multiple of 128 (simple path) + tiny block target to exercise the ragged cdiv grid.
    x2 = jax.random.normal(k1, (2, 70, 128), dtype=jnp.float32)
    w2 = jax.random.normal(k2, (128,), dtype=jnp.float32)
    out2 = jax.block_until_ready(biasfree_layernorm(x2, w2, target_block_elems=1024))
    assert jnp.allclose(out2, _reference(x2, w2), atol=1e-5, rtol=1e-5), "mismatch (ragged)"

    # rows % g != 0: row-padded lane-dense path (pads 1 row, g=8).
    x3 = jax.random.normal(k0, (3, 5, 48), dtype=jnp.float32)
    w3 = jnp.ones((48,), dtype=jnp.float32)
    out3 = jax.block_until_ready(biasfree_layernorm(x3, w3))
    assert jnp.allclose(out3, _reference(x3, w3), atol=1e-5, rtol=1e-5), "mismatch (row-pad)"

    # Degenerate tiny input (rows < pack factor): lane-sparse fallback still correct.
    x4 = jax.random.normal(k3, (1, 2, 48), dtype=jnp.float32)
    w4 = jnp.ones((48,), dtype=jnp.float32)
    out4 = jax.block_until_ready(biasfree_layernorm(x4, w4))
    assert jnp.allclose(out4, _reference(x4, w4), atol=1e-5, rtol=1e-5), "mismatch (fallback)"

    # Medium case exercising the multi-step pipelined grid (>= 4 blocks with default targets).
    x5 = jax.random.normal(k1, (4, 2048, 128), dtype=jnp.float32)
    w5 = jax.random.normal(k3, (128,), dtype=jnp.float32)
    out5 = jax.block_until_ready(biasfree_layernorm(x5, w5))
    assert jnp.allclose(out5, _reference(x5, w5), atol=1e-5, rtol=1e-5), "mismatch (multi-block)"

    print("KERNEL_OK")
</pallas_src>

<mosaic_0001>
module attributes {stable_mosaic.version = 11 : i64} {
  func.func @_biasfree_ln_kernel_packed(%arg0: i32, %arg1: memref<4x128xf32, #tpu.memory_space<vmem>>, %arg2: memref<1x128xf32, #tpu.memory_space<vmem>>, %arg3: memref<128x4xf32, #tpu.memory_space<vmem>>, %arg4: memref<4x128xf32, #tpu.memory_space<vmem>>, %arg5: memref<4x128xf32, #tpu.memory_space<vmem>>) attributes {dimension_semantics = [#tpu.dimension_semantics<parallel>], iteration_bounds = array<i64: 1>, scalar_prefetch = 0 : i64, scratch_operands = 0 : i64, tpu.core_type = #tpu.core_type<tc>, window_params = [{transform_indices = @transform_0, window_bounds = array<i64: 4, 128>}, {pipeline_mode = #tpu.pipeline_mode<synchronous>, transform_indices = @transform_1, window_bounds = array<i64: 1, 128>}, {pipeline_mode = #tpu.pipeline_mode<synchronous>, transform_indices = @transform_2, window_bounds = array<i64: 128, 4>}, {pipeline_mode = #tpu.pipeline_mode<synchronous>, transform_indices = @transform_3, window_bounds = array<i64: 4, 128>}, {transform_indices = @transform_4, window_bounds = array<i64: 4, 128>}]} {
    %c0 = arith.constant 0 : index
    %c0_0 = arith.constant 0 : index
    %0 = vector.load %arg1[%c0, %c0_0] : memref<4x128xf32, #tpu.memory_space<vmem>>, vector<4x128xf32>
    %c0_1 = arith.constant 0 : index
    %c0_2 = arith.constant 0 : index
    %1 = vector.load %arg2[%c0_1, %c0_2] : memref<1x128xf32, #tpu.memory_space<vmem>>, vector<1x128xf32>
    %c0_3 = arith.constant 0 : index
    %c0_4 = arith.constant 0 : index
    %2 = vector.load %arg3[%c0_3, %c0_4] : memref<128x4xf32, #tpu.memory_space<vmem>>, vector<128x4xf32>
    %c0_5 = arith.constant 0 : index
    %c0_6 = arith.constant 0 : index
    %3 = vector.load %arg4[%c0_5, %c0_6] : memref<4x128xf32, #tpu.memory_space<vmem>>, vector<4x128xf32>
    %cst = arith.constant dense<0.000000e+00> : vector<4x4xf32>
    %4 = tpu.matmul %0, %2, %cst {dimension_numbers = #tpu.dot_dimension_numbers<[1], [0], [0], [1], [0, 0, 1, 1], [], []>, precision = #tpu.contract_precision<fp32>} : vector<4x128xf32>, vector<128x4xf32>, vector<4x4xf32> -> vector<4x4xf32>
    %5 = arith.mulf %0, %0 : vector<4x128xf32>
    %cst_7 = arith.constant dense<0.000000e+00> : vector<4x4xf32>
    %6 = tpu.matmul %5, %2, %cst_7 {dimension_numbers = #tpu.dot_dimension_numbers<[1], [0], [0], [1], [0, 0, 1, 1], [], []>, precision = #tpu.contract_precision<fp32>} : vector<4x128xf32>, vector<128x4xf32>, vector<4x4xf32> -> vector<4x4xf32>
    %cst_8 = arith.constant 3.125000e-02 : f32
    %7 = vector.broadcast %cst_8 : f32 to vector<4x4xf32>
    %8 = arith.mulf %4, %7 : vector<4x4xf32>
    %cst_9 = arith.constant 3.125000e-02 : f32
    %9 = vector.broadcast %cst_9 : f32 to vector<4x4xf32>
    %10 = arith.mulf %6, %9 : vector<4x4xf32>
    %11 = arith.mulf %8, %8 : vector<4x4xf32>
    %12 = arith.subf %10, %11 : vector<4x4xf32>
    %cst_10 = arith.constant 0.000000e+00 : f32
    %13 = vector.broadcast %cst_10 : f32 to vector<4x4xf32>
    %14 = arith.maximumf %12, %13 : vector<4x4xf32>
    %cst_11 = arith.constant 9.99999974E-6 : f32
    %15 = vector.broadcast %cst_11 : f32 to vector<4x4xf32>
    %16 = arith.addf %14, %15 : vector<4x4xf32>
    %17 = math.rsqrt %16 : vector<4x4xf32>
    %cst_12 = arith.constant dense<0.000000e+00> : vector<4x128xf32>
    %18 = tpu.matmul %17, %3, %cst_12 {dimension_numbers = #tpu.dot_dimension_numbers<[1], [0], [0], [1], [0, 0, 1, 1], [], []>, precision = #tpu.contract_precision<fp32>} : vector<4x4xf32>, vector<4x128xf32>, vector<4x128xf32> -> vector<4x128xf32>
    %19 = arith.mulf %0, %18 : vector<4x128xf32>
    %20 = vector.broadcast %1 : vector<1x128xf32> to vector<4x128xf32>
    %21 = arith.mulf %19, %20 : vector<4x128xf32>
    %c0_13 = arith.constant 0 : index
    %c0_14 = arith.constant 0 : index
    %22 = vector.load %arg5[%c0_13, %c0_14] : memref<4x128xf32, #tpu.memory_space<vmem>>, vector<4x128xf32>
    tpu.vector_store %arg5[%c0_13, %c0_14], %21 {strides = array<i32>} : memref<4x128xf32, #tpu.memory_space<vmem>>, vector<4x128xf32>,
    return
  }
  func.func @transform_0(%arg0: i32) -> (i32, i32) {
    %c0_i32 = arith.constant 0 : i32
    %c0_i32_0 = arith.constant 0 : i32
    return %arg0, %c0_i32 : i32, i32
  }
  func.func @transform_1(%arg0: i32) -> (i32, i32) {
    %c0_i32 = arith.constant 0 : i32
    %c0_i32_0 = arith.constant 0 : i32
    %c0_i32_1 = arith.constant 0 : i32
    return %c0_i32, %c0_i32_0 : i32, i32
  }
  func.func @transform_2(%arg0: i32) -> (i32, i32) {
    %c0_i32 = arith.constant 0 : i32
    %c0_i32_0 = arith.constant 0 : i32
    %c0_i32_1 = arith.constant 0 : i32
    return %c0_i32, %c0_i32_0 : i32, i32
  }
  func.func @transform_3(%arg0: i32) -> (i32, i32) {
    %c0_i32 = arith.constant 0 : i32
    %c0_i32_0 = arith.constant 0 : i32
    %c0_i32_1 = arith.constant 0 : i32
    return %c0_i32, %c0_i32_0 : i32, i32
  }
  func.func @transform_4(%arg0: i32) -> (i32, i32) {
    %c0_i32 = arith.constant 0 : i32
    %c0_i32_0 = arith.constant 0 : i32
    return %arg0, %c0_i32 : i32, i32
  }
}

</mosaic_0001>

<llo_original>
// kernel: tpu_custom_call.1
$region0: #{tpu_custom_call.1}
  #allocation0 [shape = 'u32[]', space=smem, size = 0x4, offset = 0x4, fixed_abs, tag = 'smem constant byte address 0x4 - core index']
  #allocation1 [shape = 'u32[72,128]{1,0:T(1,128)}', space=vmem, size = 0x9000, scoped, tag = 'internal scratch']
  %s0 = inlined_call_operand.vmem [shape: f32[4,128], index: 0, kind: input, shape index: {}]
  %s1 = inlined_call_operand.vmem [shape: f32[1,128], index: 1, kind: input, shape index: {}]
  %s2 = inlined_call_operand.vmem [shape: f32[128,4], index: 2, kind: input, shape index: {}]
  %s3 = inlined_call_operand.vmem [shape: f32[4,128], index: 3, kind: input, shape index: {}]
  %s4 = inlined_call_operand.hbm [shape: f32[4,128], index: 4, kind: output, shape index: {}]
  %s5 = sld [smem:[#allocation0]]
  $region26: #{tpu_custom_call.1} parent=0
    _
  %s7 = ssub.s32 1, %s5
  %s8 = scalar_select 0, %s7, %s5
  $region1: #{tpu_custom_call.1} parent=0
    #allocation2 [shape = 'u8[2048]{0}', space=vmem, size = 0x800, scoped, tag = 'output window, operand 0, single buffered']
    #allocation3 [shape = 's32[1]{0}', space=sflag, size = 0x4, scoped, tag = 'scoped memory for tpu_custom_call.1']
    %9 = vsyncpa [#allocation3], 0
    // Predicated region
    $region2: #{tpu_custom_call.1} parent=1 // pred_check
      _
    $region3: #{tpu_custom_call.1} parent=1 // pred_check_branch
      %11 = sbr.rel (0) target = $region5
    $region4: #{tpu_custom_call.1} parent=1 // pred_region
      _
    $region5: #{tpu_custom_call.1} parent=1 // pred_fallthru
      _
    // Predicated region
    $region6: #{tpu_custom_call.1} parent=1 // pred_check
      _
    $region7: #{tpu_custom_call.1} parent=1 // pred_check_branch
      %13 = sbr.rel (0) target = $region9
    $region8: #{tpu_custom_call.1} parent=1 // pred_region
      _
    $region9: #{tpu_custom_call.1} parent=1 // pred_fallthru
      _
    // Predicated region
    $region10: #{tpu_custom_call.1} parent=1 // pred_check
      _
    $region11: #{tpu_custom_call.1} parent=1 // pred_check_branch
      %15 = sbr.rel (0) target = $region13
    $region12: #{tpu_custom_call.1} parent=1 // pred_region
      _
    $region13: #{tpu_custom_call.1} parent=1 // pred_fallthru
      _
    // Predicated region
    $region14: #{tpu_custom_call.1} parent=1 // pred_check
      _
    $region15: #{tpu_custom_call.1} parent=1 // pred_check_branch
      %17 = sbr.rel (0) target = $region17
    $region16: #{tpu_custom_call.1} parent=1 // pred_region
      _
    $region17: #{tpu_custom_call.1} parent=1 // pred_fallthru
      _
    %v18 = vld [vmem:[%s0] sm:$0xf]
    %v19 = vld [vmem:[%s1] sm:$0x1]
    %v20 = vld [vmem:[%s2] sm:$0xff]
    %v21 = vld [vmem:[%s2 + $0x8] sm:$0xff]
    %v22 = vld [vmem:[%s2 + $0x10] sm:$0xff]
    %v23 = vld [vmem:[%s2 + $0x18] sm:$0xff]
    %v24 = vld [vmem:[%s2 + $0x20] sm:$0xff]
    %v25 = vld [vmem:[%s2 + $0x28] sm:$0xff]
    %v26 = vld [vmem:[%s2 + $0x30] sm:$0xff]
    %v27 = vld [vmem:[%s2 + $0x38] sm:$0xff]
    %v28 = vld [vmem:[%s2 + $0x40] sm:$0xff]
    %v29 = vld [vmem:[%s2 + $0x48] sm:$0xff]
    %v30 = vld [vmem:[%s2 + $0x50] sm:$0xff]
    %v31 = vld [vmem:[%s2 + $0x58] sm:$0xff]
    %v32 = vld [vmem:[%s2 + $0x60] sm:$0xff]
    %v33 = vld [vmem:[%s2 + $0x68] sm:$0xff]
    %v34 = vld [vmem:[%s2 + $0x70] sm:$0xff]
    %v35 = vld [vmem:[%s2 + $0x78] sm:$0xff]
    %v36 = vld [vmem:[%s3] sm:$0xf]
    %v37 = vand.u32 %v35, 4294901760
    %38 = vmatpush.msra.mxu0 %v37
    %v39 = vand.u32 %v34, 4294901760
    %40 = vmatpush.msra.mxu0 %v39
    %v41 = vand.u32 %v33, 4294901760
    %42 = vmatpush.msra.mxu0 %v41
    %v43 = vand.u32 %v32, 4294901760
    %44 = vmatpush.msra.mxu0 %v43
    %v45 = vand.u32 %v31, 4294901760
    %46 = vmatpush.msra.mxu0 %v45
    %v47 = vand.u32 %v30, 4294901760
    %48 = vmatpush.msra.mxu0 %v47
    %v49 = vand.u32 %v29, 4294901760
    %50 = vmatpush.msra.mxu0 %v49
    %v51 = vand.u32 %v28, 4294901760
    %52 = vmatpush.msra.mxu0 %v51
    %v53 = vand.u32 %v27, 4294901760
    %54 = vmatpush.msra.mxu0 %v53
    %v55 = vand.u32 %v26, 4294901760
    %56 = vmatpush.msra.mxu0 %v55
    %v57 = vand.u32 %v25, 4294901760
    %58 = vmatpush.msra.mxu0 %v57
    %v59 = vand.u32 %v24, 4294901760
    %60 = vmatpush.msra.mxu0 %v59
    %v61 = vand.u32 %v23, 4294901760
    %62 = vmatpush.msra.mxu0 %v61
    %v63 = vand.u32 %v22, 4294901760
    %64 = vmatpush.msra.mxu0 %v63
    %v65 = vand.u32 %v21, 4294901760
    %66 = vmatpush.msra.mxu0 %v65
    %v67 = vand.u32 %v20, 4294901760
    %68 = vmatpush.msra.mxu0 %v67
    %v69 = vand.u32 %v18, 4294901760
    %v70 = vsub.f32 %v18, %v69
    %v71 = vand.u32 %v70, 4294901760
    %v72 = vsub.f32 %v70, %v71
    %v73 = vand.u32 %v72, 4294901760
    %74 = vmatmul.f32.gmra.mxu0 %v73
    %v75 = vpop.f32.mrf.mxu0
    %v76 = vadd.f32 0.0, %v75
    %77 = vdwg.mxu0
    %v78 = vand.u32 %v35, 4294901760
    %v79 = vsub.f32 %v35, %v78
    %v80 = vand.u32 %v79, 4294901760
    %v81 = vsub.f32 %v79, %v80
    %v82 = vand.u32 %v81, 4294901760
    %83 = vmatpush.msra.mxu0 %v82
    %v84 = vand.u32 %v34, 4294901760
    %v85 = vsub.f32 %v34, %v84
    %v86 = vand.u32 %v85, 4294901760
    %v87 = vsub.f32 %v85, %v86
    %v88 = vand.u32 %v87, 4294901760
    %89 = vmatpush.msra.mxu0 %v88
    %v90 = vand.u32 %v33, 4294901760
    %v91 = vsub.f32 %v33, %v90
    %v92 = vand.u32 %v91, 4294901760
    %v93 = vsub.f32 %v91, %v92
    %v94 = vand.u32 %v93, 4294901760
    %95 = vmatpush.msra.mxu0 %v94
    %v96 = vand.u32 %v32, 4294901760
    %v97 = vsub.f32 %v32, %v96
    %v98 = vand.u32 %v97, 4294901760
    %v99 = vsub.f32 %v97, %v98
    %v100 = vand.u32 %v99, 4294901760
    %101 = vmatpush.msra.mxu0 %v100
    %v102 = vand.u32 %v31, 4294901760
    %v103 = vsub.f32 %v31, %v102
    %v104 = vand.u32 %v103, 4294901760
    %v105 = vsub.f32 %v103, %v104
    %v106 = vand.u32 %v105, 4294901760
    %107 = vmatpush.msra.mxu0 %v106
    %v108 = vand.u32 %v30, 4294901760
    %v109 = vsub.f32 %v30, %v108
    %v110 = vand.u32 %v109, 4294901760
    %v111 = vsub.f32 %v109, %v110
    %v112 = vand.u32 %v111, 4294901760
    %113 = vmatpush.msra.mxu0 %v112
    %v114 = vand.u32 %v29, 4294901760
    %v115 = vsub.f32 %v29, %v114
    %v116 = vand.u32 %v115, 4294901760
    %v117 = vsub.f32 %v115, %v116
    %v118 = vand.u32 %v117, 4294901760
    %119 = vmatpush.msra.mxu0 %v118
    %v120 = vand.u32 %v28, 4294901760
    %v121 = vsub.f32 %v28, %v120
    %v122 = vand.u32 %v121, 4294901760
    %v123 = vsub.f32 %v121, %v122
    %v124 = vand.u32 %v123, 4294901760
    %125 = vmatpush.msra.mxu0 %v124
    %v126 = vand.u32 %v27, 4294901760
    %v127 = vsub.f32 %v27, %v126
    %v128 = vand.u32 %v127, 4294901760
    %v129 = vsub.f32 %v127, %v128
    %v130 = vand.u32 %v129, 4294901760
    %131 = vmatpush.msra.mxu0 %v130
    %v132 = vand.u32 %v26, 4294901760
    %v133 = vsub.f32 %v26, %v132
    %v134 = vand.u32 %v133, 4294901760
    %v135 = vsub.f32 %v133, %v134
    %v136 = vand.u32 %v135, 4294901760
    %137 = vmatpush.msra.mxu0 %v136
    %v138 = vand.u32 %v25, 4294901760
    %v139 = vsub.f32 %v25, %v138
    %v140 = vand.u32 %v139, 4294901760
    %v141 = vsub.f32 %v139, %v140
    %v142 = vand.u32 %v141, 4294901760
    %143 = vmatpush.msra.mxu0 %v142
    %v144 = vand.u32 %v24, 4294901760
    %v145 = vsub.f32 %v24, %v144
    %v146 = vand.u32 %v145, 4294901760
    %v147 = vsub.f32 %v145, %v146
    %v148 = vand.u32 %v147, 4294901760
    %149 = vmatpush.msra.mxu0 %v148
    %v150 = vand.u32 %v23, 4294901760
    %v151 = vsub.f32 %v23, %v150
    %v152 = vand.u32 %v151, 4294901760
    %v153 = vsub.f32 %v151, %v152
    %v154 = vand.u32 %v153, 4294901760
    %155 = vmatpush.msra.mxu0 %v154
    %v156 = vand.u32 %v22, 4294901760
    %v157 = vsub.f32 %v22, %v156
    %v158 = vand.u32 %v157, 4294901760
    %v159 = vsub.f32 %v157, %v158
    %v160 = vand.u32 %v159, 4294901760
    %161 = vmatpush.msra.mxu0 %v160
    %v162 = vand.u32 %v21, 4294901760
    %v163 = vsub.f32 %v21, %v162
    %v164 = vand.u32 %v163, 4294901760
    %v165 = vsub.f32 %v163, %v164
    %v166 = vand.u32 %v165, 4294901760
    %167 = vmatpush.msra.mxu0 %v166
    %v168 = vand.u32 %v20, 4294901760
    %v169 = vsub.f32 %v20, %v168
    %v170 = vand.u32 %v169, 4294901760
    %v171 = vsub.f32 %v169, %v170
    %v172 = vand.u32 %v171, 4294901760
    %173 = vmatpush.msra.mxu0 %v172
    %v174 = vand.u32 %v18, 4294901760
    %175 = vmatmul.f32.gmra.mxu0 %v174
    %v176 = vpop.f32.mrf.mxu0
    %v177 = vadd.f32 %v76, %v176
    %178 = vdwg.mxu0
    %v179 = vand.u32 %v35, 4294901760
    %v180 = vsub.f32 %v35, %v179
    %181 = vmatpush.msra.mxu0 %v180
    %v182 = vand.u32 %v34, 4294901760
    %v183 = vsub.f32 %v34, %v182
    %184 = vmatpush.msra.mxu0 %v183
    %v185 = vand.u32 %v33, 4294901760
    %v186 = vsub.f32 %v33, %v185
    %187 = vmatpush.msra.mxu0 %v186
    %v188 = vand.u32 %v32, 4294901760
    %v189 = vsub.f32 %v32, %v188
    %190 = vmatpush.msra.mxu0 %v189
    %v191 = vand.u32 %v31, 4294901760
    %v192 = vsub.f32 %v31, %v191
    %193 = vmatpush.msra.mxu0 %v192
    %v194 = vand.u32 %v30, 4294901760
    %v195 = vsub.f32 %v30, %v194
    %196 = vmatpush.msra.mxu0 %v195
    %v197 = vand.u32 %v29, 4294901760
    %v198 = vsub.f32 %v29, %v197
    %199 = vmatpush.msra.mxu0 %v198
    %v200 = vand.u32 %v28, 4294901760
    %v201 = vsub.f32 %v28, %v200
    %202 = vmatpush.msra.mxu0 %v201
    %v203 = vand.u32 %v27, 4294901760
    %v204 = vsub.f32 %v27, %v203
    %205 = vmatpush.msra.mxu0 %v204
    %v206 = vand.u32 %v26, 4294901760
    %v207 = vsub.f32 %v26, %v206
    %208 = vmatpush.msra.mxu0 %v207
    %v209 = vand.u32 %v25, 4294901760
    %v210 = vsub.f32 %v25, %v209
    %211 = vmatpush.msra.mxu0 %v210
    %v212 = vand.u32 %v24, 4294901760
    %v213 = vsub.f32 %v24, %v212
    %214 = vmatpush.msra.mxu0 %v213
    %v215 = vand.u32 %v23, 4294901760
    %v216 = vsub.f32 %v23, %v215
    %217 = vmatpush.msra.mxu0 %v216
    %v218 = vand.u32 %v22, 4294901760
    %v219 = vsub.f32 %v22, %v218
    %220 = vmatpush.msra.mxu0 %v219
    %v221 = vand.u32 %v21, 4294901760
    %v222 = vsub.f32 %v21, %v221
    %223 = vmatpush.msra.mxu0 %v222
    %v224 = vand.u32 %v20, 4294901760
    %v225 = vsub.f32 %v20, %v224
    %226 = vmatpush.msra.mxu0 %v225
    %v227 = vand.u32 %v18, 4294901760
    %v228 = vsub.f32 %v18, %v227
    %229 = vmatmul.f32.gmra.mxu0 %v228
    %v230 = vpop.f32.mrf.mxu0
    %v231 = vadd.f32 %v177, %v230
    %232 = vdwg.mxu0
    %v233 = vand.u32 %v35, 4294901760
    %234 = vmatpush.msra.mxu0 %v233
    %v235 = vand.u32 %v34, 4294901760
    %236 = vmatpush.msra.mxu0 %v235
    %v237 = vand.u32 %v33, 4294901760
    %238 = vmatpush.msra.mxu0 %v237
    %v239 = vand.u32 %v32, 4294901760
    %240 = vmatpush.msra.mxu0 %v239
    %v241 = vand.u32 %v31, 4294901760
    %242 = vmatpush.msra.mxu0 %v241
    %v243 = vand.u32 %v30, 4294901760
    %244 = vmatpush.msra.mxu0 %v243
    %v245 = vand.u32 %v29, 4294901760
    %246 = vmatpush.msra.mxu0 %v245
    %v247 = vand.u32 %v28, 4294901760
    %248 = vmatpush.msra.mxu0 %v247
    %v249 = vand.u32 %v27, 4294901760
    %250 = vmatpush.msra.mxu0 %v249
    %v251 = vand.u32 %v26, 4294901760
    %252 = vmatpush.msra.mxu0 %v251
    %v253 = vand.u32 %v25, 4294901760
    %254 = vmatpush.msra.mxu0 %v253
    %v255 = vand.u32 %v24, 4294901760
    %256 = vmatpush.msra.mxu0 %v255
    %v257 = vand.u32 %v23, 4294901760
    %258 = vmatpush.msra.mxu0 %v257
    %v259 = vand.u32 %v22, 4294901760
    %260 = vmatpush.msra.mxu0 %v259
    %v261 = vand.u32 %v21, 4294901760
    %262 = vmatpush.msra.mxu0 %v261
    %v263 = vand.u32 %v20, 4294901760
    %264 = vmatpush.msra.mxu0 %v263
    %v265 = vand.u32 %v18, 4294901760
    %v266 = vsub.f32 %v18, %v265
    %v267 = vand.u32 %v266, 4294901760
    %268 = vmatmul.f32.gmra.mxu0 %v267
    %v269 = vpop.f32.mrf.mxu0
    %v270 = vadd.f32 %v231, %v269
    %271 = vdwg.mxu0
    %v272 = vand.u32 %v35, 4294901760
    %v273 = vsub.f32 %v35, %v272
    %v274 = vand.u32 %v273, 4294901760
    %275 = vmatpush.msra.mxu0 %v274
    %v276 = vand.u32 %v34, 4294901760
    %v277 = vsub.f32 %v34, %v276
    %v278 = vand.u32 %v277, 4294901760
    %279 = vmatpush.msra.mxu0 %v278
    %v280 = vand.u32 %v33, 4294901760
    %v281 = vsub.f32 %v33, %v280
    %v282 = vand.u32 %v281, 4294901760
    %283 = vmatpush.msra.mxu0 %v282
    %v284 = vand.u32 %v32, 4294901760
    %v285 = vsub.f32 %v32, %v284
    %v286 = vand.u32 %v285, 4294901760
    %287 = vmatpush.msra.mxu0 %v286
    %v288 = vand.u32 %v31, 4294901760
    %v289 = vsub.f32 %v31, %v288
    %v290 = vand.u32 %v289, 4294901760
    %291 = vmatpush.msra.mxu0 %v290
    %v292 = vand.u32 %v30, 4294901760
    %v293 = vsub.f32 %v30, %v292
    %v294 = vand.u32 %v293, 4294901760
    %295 = vmatpush.msra.mxu0 %v294
    %v296 = vand.u32 %v29, 4294901760
    %v297 = vsub.f32 %v29, %v296
    %v298 = vand.u32 %v297, 4294901760
    %299 = vmatpush.msra.mxu0 %v298
    %v300 = vand.u32 %v28, 4294901760
    %v301 = vsub.f32 %v28, %v300
    %v302 = vand.u32 %v301, 4294901760
    %303 = vmatpush.msra.mxu0 %v302
    %v304 = vand.u32 %v27, 4294901760
    %v305 = vsub.f32 %v27, %v304
    %v306 = vand.u32 %v305, 4294901760
    %307 = vmatpush.msra.mxu0 %v306
    %v308 = vand.u32 %v26, 4294901760
    %v309 = vsub.f32 %v26, %v308
    %v310 = vand.u32 %v309, 4294901760
    %311 = vmatpush.msra.mxu0 %v310
    %v312 = vand.u32 %v25, 4294901760
    %v313 = vsub.f32 %v25, %v312
    %v314 = vand.u32 %v313, 4294901760
    %315 = vmatpush.msra.mxu0 %v314
    %v316 = vand.u32 %v24, 4294901760
    %v317 = vsub.f32 %v24, %v316
    %v318 = vand.u32 %v317, 4294901760
    %319 = vmatpush.msra.mxu0 %v318
    %v320 = vand.u32 %v23, 4294901760
    %v321 = vsub.f32 %v23, %v320
    %v322 = vand.u32 %v321, 4294901760
    %323 = vmatpush.msra.mxu0 %v322
    %v324 = vand.u32 %v22, 4294901760
    %v325 = vsub.f32 %v22, %v324
    %v326 = vand.u32 %v325, 4294901760
    %327 = vmatpush.msra.mxu0 %v326
    %v328 = vand.u32 %v21, 4294901760
    %v329 = vsub.f32 %v21, %v328
    %v330 = vand.u32 %v329, 4294901760
    %331 = vmatpush.msra.mxu0 %v330
    %v332 = vand.u32 %v20, 4294901760
    %v333 = vsub.f32 %v20, %v332
    %v334 = vand.u32 %v333, 4294901760
    %335 = vmatpush.msra.mxu0 %v334
    %v336 = vand.u32 %v18, 4294901760
    %337 = vmatmul.f32.gmra.mxu0 %v336
    %v338 = vpop.f32.mrf.mxu0
    %v339 = vadd.f32 %v270, %v338
    %340 = vdwg.mxu0
    %v341 = vand.u32 %v35, 4294901760
    %342 = vmatpush.msra.mxu0 %v341
    %v343 = vand.u32 %v34, 4294901760
    %344 = vmatpush.msra.mxu0 %v343
    %v345 = vand.u32 %v33, 4294901760
    %346 = vmatpush.msra.mxu0 %v345
    %v347 = vand.u32 %v32, 4294901760
    %348 = vmatpush.msra.mxu0 %v347
    %v349 = vand.u32 %v31, 4294901760
    %350 = vmatpush.msra.mxu0 %v349
    %v351 = vand.u32 %v30, 4294901760
    %352 = vmatpush.msra.mxu0 %v351
    %v353 = vand.u32 %v29, 4294901760
    %354 = vmatpush.msra.mxu0 %v353
    %v355 = vand.u32 %v28, 4294901760
    %356 = vmatpush.msra.mxu0 %v355
    %v357 = vand.u32 %v27, 4294901760
    %358 = vmatpush.msra.mxu0 %v357
    %v359 = vand.u32 %v26, 4294901760
    %360 = vmatpush.msra.mxu0 %v359
    %v361 = vand.u32 %v25, 4294901760
    %362 = vmatpush.msra.mxu0 %v361
    %v363 = vand.u32 %v24, 4294901760
    %364 = vmatpush.msra.mxu0 %v363
    %v365 = vand.u32 %v23, 4294901760
    %366 = vmatpush.msra.mxu0 %v365
    %v367 = vand.u32 %v22, 4294901760
    %368 = vmatpush.msra.mxu0 %v367
    %v369 = vand.u32 %v21, 4294901760
    %370 = vmatpush.msra.mxu0 %v369
    %v371 = vand.u32 %v20, 4294901760
    %372 = vmatpush.msra.mxu0 %v371
    %v373 = vand.u32 %v18, 4294901760
    %374 = vmatmul.f32.gmra.mxu0 %v373
    %v375 = vpop.f32.mrf.mxu0
    %v376 = vadd.f32 %v339, %v375
    %377 = vdwg.mxu0
    %v378 = vmul.f32 %v18, %v18
    %v379 = vand.u32 %v35, 4294901760
    %380 = vmatpush.msra.mxu0 %v379
    %v381 = vand.u32 %v34, 4294901760
    %382 = vmatpush.msra.mxu0 %v381
    %v383 = vand.u32 %v33, 4294901760
    %384 = vmatpush.msra.mxu0 %v383
    %v385 = vand.u32 %v32, 4294901760
    %386 = vmatpush.msra.mxu0 %v385
    %v387 = vand.u32 %v31, 4294901760
    %388 = vmatpush.msra.mxu0 %v387
    %v389 = vand.u32 %v30, 4294901760
    %390 = vmatpush.msra.mxu0 %v389
    %v391 = vand.u32 %v29, 4294901760
    %392 = vmatpush.msra.mxu0 %v391
    %v393 = vand.u32 %v28, 4294901760
    %394 = vmatpush.msra.mxu0 %v393
    %v395 = vand.u32 %v27, 4294901760
    %396 = vmatpush.msra.mxu0 %v395
    %v397 = vand.u32 %v26, 4294901760
    %398 = vmatpush.msra.mxu0 %v397
    %v399 = vand.u32 %v25, 4294901760
    %400 = vmatpush.msra.mxu0 %v399
    %v401 = vand.u32 %v24, 4294901760
    %402 = vmatpush.msra.mxu0 %v401
    %v403 = vand.u32 %v23, 4294901760
    %404 = vmatpush.msra.mxu0 %v403
    %v405 = vand.u32 %v22, 4294901760
    %406 = vmatpush.msra.mxu0 %v405
    %v407 = vand.u32 %v21, 4294901760
    %408 = vmatpush.msra.mxu0 %v407
    %v409 = vand.u32 %v20, 4294901760
    %410 = vmatpush.msra.mxu0 %v409
    %v411 = vand.u32 %v378, 4294901760
    %v412 = vsub.f32 %v378, %v411
    %v413 = vand.u32 %v412, 4294901760
    %v414 = vsub.f32 %v412, %v413
    %v415 = vand.u32 %v414, 4294901760
    %416 = vmatmul.f32.gmra.mxu0 %v415
    %v417 = vpop.f32.mrf.mxu0
    %v418 = vadd.f32 0.0, %v417
    %419 = vdwg.mxu0
    %v420 = vand.u32 %v35, 4294901760
    %v421 = vsub.f32 %v35, %v420
    %v422 = vand.u32 %v421, 4294901760
    %v423 = vsub.f32 %v421, %v422
    %v424 = vand.u32 %v423, 4294901760
    %425 = vmatpush.msra.mxu0 %v424
    %v426 = vand.u32 %v34, 4294901760
    %v427 = vsub.f32 %v34, %v426
    %v428 = vand.u32 %v427, 4294901760
    %v429 = vsub.f32 %v427, %v428
    %v430 = vand.u32 %v429, 4294901760
    %431 = vmatpush.msra.mxu0 %v430
    %v432 = vand.u32 %v33, 4294901760
    %v433 = vsub.f32 %v33, %v432
    %v434 = vand.u32 %v433, 4294901760
    %v435 = vsub.f32 %v433, %v434
    %v436 = vand.u32 %v435, 4294901760
    %437 = vmatpush.msra.mxu0 %v436
    %v438 = vand.u32 %v32, 4294901760
    %v439 = vsub.f32 %v32, %v438
    %v440 = vand.u32 %v439, 4294901760
    %v441 = vsub.f32 %v439, %v440
    %v442 = vand.u32 %v441, 4294901760
    %443 = vmatpush.msra.mxu0 %v442
    %v444 = vand.u32 %v31, 4294901760
    %v445 = vsub.f32 %v31, %v444
    %v446 = vand.u32 %v445, 4294901760
    %v447 = vsub.f32 %v445, %v446
    %v448 = vand.u32 %v447, 4294901760
    %449 = vmatpush.msra.mxu0 %v448
    %v450 = vand.u32 %v30, 4294901760
    %v451 = vsub.f32 %v30, %v450
    %v452 = vand.u32 %v451, 4294901760
    %v453 = vsub.f32 %v451, %v452
    %v454 = vand.u32 %v453, 4294901760
    %455 = vmatpush.msra.mxu0 %v454
    %v456 = vand.u32 %v29, 4294901760
    %v457 = vsub.f32 %v29, %v456
    %v458 = vand.u32 %v457, 4294901760
    %v459 = vsub.f32 %v457, %v458
    %v460 = vand.u32 %v459, 4294901760
    %461 = vmatpush.msra.mxu0 %v460
    %v462 = vand.u32 %v28, 4294901760
    %v463 = vsub.f32 %v28, %v462
    %v464 = vand.u32 %v463, 4294901760
    %v465 = vsub.f32 %v463, %v464
    %v466 = vand.u32 %v465, 4294901760
    %467 = vmatpush.msra.mxu0 %v466
    %v468 = vand.u32 %v27, 4294901760
    %v469 = vsub.f32 %v27, %v468
    %v470 = vand.u32 %v469, 4294901760
    %v471 = vsub.f32 %v469, %v470
    %v472 = vand.u32 %v471, 4294901760
    %473 = vmatpush.msra.mxu0 %v472
    %v474 = vand.u32 %v26, 4294901760
    %v475 = vsub.f32 %v26, %v474
    %v476 = vand.u32 %v475, 4294901760
    %v477 = vsub.f32 %v475, %v476
    %v478 = vand.u32 %v477, 4294901760
    %479 = vmatpush.msra.mxu0 %v478
    %v480 = vand.u32 %v25, 4294901760
    %v481 = vsub.f32 %v25, %v480
    %v482 = vand.u32 %v481, 4294901760
    %v483 = vsub.f32 %v481, %v482
    %v484 = vand.u32 %v483, 4294901760
    %485 = vmatpush.msra.mxu0 %v484
    %v486 = vand.u32 %v24, 4294901760
    %v487 = vsub.f32 %v24, %v486
    %v488 = vand.u32 %v487, 4294901760
    %v489 = vsub.f32 %v487, %v488
    %v490 = vand.u32 %v489, 4294901760
    %491 = vmatpush.msra.mxu0 %v490
    %v492 = vand.u32 %v23, 4294901760
    %v493 = vsub.f32 %v23, %v492
    %v494 = vand.u32 %v493, 4294901760
    %v495 = vsub.f32 %v493, %v494
    %v496 = vand.u32 %v495, 4294901760
    %497 = vmatpush.msra.mxu0 %v496
    %v498 = vand.u32 %v22, 4294901760
    %v499 = vsub.f32 %v22, %v498
    %v500 = vand.u32 %v499, 4294901760
    %v501 = vsub.f32 %v499, %v500
    %v502 = vand.u32 %v501, 4294901760
    %503 = vmatpush.msra.mxu0 %v502
    %v504 = vand.u32 %v21, 4294901760
    %v505 = vsub.f32 %v21, %v504
    %v506 = vand.u32 %v505, 4294901760
    %v507 = vsub.f32 %v505, %v506
    %v508 = vand.u32 %v507, 4294901760
    %509 = vmatpush.msra.mxu0 %v508
    %v510 = vand.u32 %v20, 4294901760
    %v511 = vsub.f32 %v20, %v510
    %v512 = vand.u32 %v511, 4294901760
    %v513 = vsub.f32 %v511, %v512
    %v514 = vand.u32 %v513, 4294901760
    %515 = vmatpush.msra.mxu0 %v514
    %v516 = vand.u32 %v378, 4294901760
    %517 = vmatmul.f32.gmra.mxu0 %v516
    %v518 = vpop.f32.mrf.mxu0
    %v519 = vadd.f32 %v418, %v518
    %520 = vdwg.mxu0
    %v521 = vand.u32 %v35, 4294901760
    %v522 = vsub.f32 %v35, %v521
    %523 = vmatpush.msra.mxu0 %v522
    %v524 = vand.u32 %v34, 4294901760
    %v525 = vsub.f32 %v34, %v524
    %526 = vmatpush.msra.mxu0 %v525
    %v527 = vand.u32 %v33, 4294901760
    %v528 = vsub.f32 %v33, %v527
    %529 = vmatpush.msra.mxu0 %v528
    %v530 = vand.u32 %v32, 4294901760
    %v531 = vsub.f32 %v32, %v530
    %532 = vmatpush.msra.mxu0 %v531
    %v533 = vand.u32 %v31, 4294901760
    %v534 = vsub.f32 %v31, %v533
    %535 = vmatpush.msra.mxu0 %v534
    %v536 = vand.u32 %v30, 4294901760
    %v537 = vsub.f32 %v30, %v536
    %538 = vmatpush.msra.mxu0 %v537
    %v539 = vand.u32 %v29, 4294901760
    %v540 = vsub.f32 %v29, %v539
    %541 = vmatpush.msra.mxu0 %v540
    %v542 = vand.u32 %v28, 4294901760
    %v543 = vsub.f32 %v28, %v542
    %544 = vmatpush.msra.mxu0 %v543
    %v545 = vand.u32 %v27, 4294901760
    %v546 = vsub.f32 %v27, %v545
    %547 = vmatpush.msra.mxu0 %v546
    %v548 = vand.u32 %v26, 4294901760
    %v549 = vsub.f32 %v26, %v548
    %550 = vmatpush.msra.mxu0 %v549
    %v551 = vand.u32 %v25, 4294901760
    %v552 = vsub.f32 %v25, %v551
    %553 = vmatpush.msra.mxu0 %v552
    %v554 = vand.u32 %v24, 4294901760
    %v555 = vsub.f32 %v24, %v554
    %556 = vmatpush.msra.mxu0 %v555
    %v557 = vand.u32 %v23, 4294901760
    %v558 = vsub.f32 %v23, %v557
    %559 = vmatpush.msra.mxu0 %v558
    %v560 = vand.u32 %v22, 4294901760
    %v561 = vsub.f32 %v22, %v560
    %562 = vmatpush.msra.mxu0 %v561
    %v563 = vand.u32 %v21, 4294901760
    %v564 = vsub.f32 %v21, %v563
    %565 = vmatpush.msra.mxu0 %v564
    %v566 = vand.u32 %v20, 4294901760
    %v567 = vsub.f32 %v20, %v566
    %568 = vmatpush.msra.mxu0 %v567
    %v569 = vand.u32 %v378, 4294901760
    %v570 = vsub.f32 %v378, %v569
    %571 = vmatmul.f32.gmra.mxu0 %v570
    %v572 = vpop.f32.mrf.mxu0
    %v573 = vadd.f32 %v519, %v572
    %574 = vdwg.mxu0
    %v575 = vand.u32 %v35, 4294901760
    %576 = vmatpush.msra.mxu0 %v575
    %v577 = vand.u32 %v34, 4294901760
    %578 = vmatpush.msra.mxu0 %v577
    %v579 = vand.u32 %v33, 4294901760
    %580 = vmatpush.msra.mxu0 %v579
    %v581 = vand.u32 %v32, 4294901760
    %582 = vmatpush.msra.mxu0 %v581
    %v583 = vand.u32 %v31, 4294901760
    %584 = vmatpush.msra.mxu0 %v583
    %v585 = vand.u32 %v30, 4294901760
    %586 = vmatpush.msra.mxu0 %v585
    %v587 = vand.u32 %v29, 4294901760
    %588 = vmatpush.msra.mxu0 %v587
    %v589 = vand.u32 %v28, 4294901760
    %590 = vmatpush.msra.mxu0 %v589
    %v591 = vand.u32 %v27, 4294901760
    %592 = vmatpush.msra.mxu0 %v591
    %v593 = vand.u32 %v26, 4294901760
    %594 = vmatpush.msra.mxu0 %v593
    %v595 = vand.u32 %v25, 4294901760
    %596 = vmatpush.msra.mxu0 %v595
    %v597 = vand.u32 %v24, 4294901760
    %598 = vmatpush.msra.mxu0 %v597
    %v599 = vand.u32 %v23, 4294901760
    %600 = vmatpush.msra.mxu0 %v599
    %v601 = vand.u32 %v22, 4294901760
    %602 = vmatpush.msra.mxu0 %v601
    %v603 = vand.u32 %v21, 4294901760
    %604 = vmatpush.msra.mxu0 %v603
    %v605 = vand.u32 %v20, 4294901760
    %606 = vmatpush.msra.mxu0 %v605
    %v607 = vand.u32 %v378, 4294901760
    %v608 = vsub.f32 %v378, %v607
    %v609 = vand.u32 %v608, 4294901760
    %610 = vmatmul.f32.gmra.mxu0 %v609
    %v611 = vpop.f32.mrf.mxu0
    %v612 = vadd.f32 %v573, %v611
    %613 = vdwg.mxu0
    %v614 = vand.u32 %v35, 4294901760
    %v615 = vsub.f32 %v35, %v614
    %v616 = vand.u32 %v615, 4294901760
    %617 = vmatpush.msra.mxu0 %v616
    %v618 = vand.u32 %v34, 4294901760
    %v619 = vsub.f32 %v34, %v618
    %v620 = vand.u32 %v619, 4294901760
    %621 = vmatpush.msra.mxu0 %v620
    %v622 = vand.u32 %v33, 4294901760
    %v623 = vsub.f32 %v33, %v622
    %v624 = vand.u32 %v623, 4294901760
    %625 = vmatpush.msra.mxu0 %v624
    %v626 = vand.u32 %v32, 4294901760
    %v627 = vsub.f32 %v32, %v626
    %v628 = vand.u32 %v627, 4294901760
    %629 = vmatpush.msra.mxu0 %v628
    %v630 = vand.u32 %v31, 4294901760
    %v631 = vsub.f32 %v31, %v630
    %v632 = vand.u32 %v631, 4294901760
    %633 = vmatpush.msra.mxu0 %v632
    %v634 = vand.u32 %v30, 4294901760
    %v635 = vsub.f32 %v30, %v634
    %v636 = vand.u32 %v635, 4294901760
    %637 = vmatpush.msra.mxu0 %v636
    %v638 = vand.u32 %v29, 4294901760
    %v639 = vsub.f32 %v29, %v638
    %v640 = vand.u32 %v639, 4294901760
    %641 = vmatpush.msra.mxu0 %v640
    %v642 = vand.u32 %v28, 4294901760
    %v643 = vsub.f32 %v28, %v642
    %v644 = vand.u32 %v643, 4294901760
    %645 = vmatpush.msra.mxu0 %v644
    %v646 = vand.u32 %v27, 4294901760
    %v647 = vsub.f32 %v27, %v646
    %v648 = vand.u32 %v647, 4294901760
    %649 = vmatpush.msra.mxu0 %v648
    %v650 = vand.u32 %v26, 4294901760
    %v651 = vsub.f32 %v26, %v650
    %v652 = vand.u32 %v651, 4294901760
    %653 = vmatpush.msra.mxu0 %v652
    %v654 = vand.u32 %v25, 4294901760
    %v655 = vsub.f32 %v25, %v654
    %v656 = vand.u32 %v655, 4294901760
    %657 = vmatpush.msra.mxu0 %v656
    %v658 = vand.u32 %v24, 4294901760
    %v659 = vsub.f32 %v24, %v658
    %v660 = vand.u32 %v659, 4294901760
    %661 = vmatpush.msra.mxu0 %v660
    %v662 = vand.u32 %v23, 4294901760
    %v663 = vsub.f32 %v23, %v662
    %v664 = vand.u32 %v663, 4294901760
    %665 = vmatpush.msra.mxu0 %v664
    %v666 = vand.u32 %v22, 4294901760
    %v667 = vsub.f32 %v22, %v666
    %v668 = vand.u32 %v667, 4294901760
    %669 = vmatpush.msra.mxu0 %v668
    %v670 = vand.u32 %v21, 4294901760
    %v671 = vsub.f32 %v21, %v670
    %v672 = vand.u32 %v671, 4294901760
    %673 = vmatpush.msra.mxu0 %v672
    %v674 = vand.u32 %v20, 4294901760
    %v675 = vsub.f32 %v20, %v674
    %v676 = vand.u32 %v675, 4294901760
    %677 = vmatpush.msra.mxu0 %v676
    %v678 = vand.u32 %v378, 4294901760
    %679 = vmatmul.f32.gmra.mxu0 %v678
    %v680 = vpop.f32.mrf.mxu0
    %v681 = vadd.f32 %v612, %v680
    %682 = vdwg.mxu0
    %v683 = vand.u32 %v35, 4294901760
    %684 = vmatpush.msra.mxu0 %v683
    %v685 = vand.u32 %v34, 4294901760
    %686 = vmatpush.msra.mxu0 %v685
    %v687 = vand.u32 %v33, 4294901760
    %688 = vmatpush.msra.mxu0 %v687
    %v689 = vand.u32 %v32, 4294901760
    %690 = vmatpush.msra.mxu0 %v689
    %v691 = vand.u32 %v31, 4294901760
    %692 = vmatpush.msra.mxu0 %v691
    %v693 = vand.u32 %v30, 4294901760
    %694 = vmatpush.msra.mxu0 %v693
    %v695 = vand.u32 %v29, 4294901760
    %696 = vmatpush.msra.mxu0 %v695
    %v697 = vand.u32 %v28, 4294901760
    %698 = vmatpush.msra.mxu0 %v697
    %v699 = vand.u32 %v27, 4294901760
    %700 = vmatpush.msra.mxu0 %v699
    %v701 = vand.u32 %v26, 4294901760
    %702 = vmatpush.msra.mxu0 %v701
    %v703 = vand.u32 %v25, 4294901760
    %704 = vmatpush.msra.mxu0 %v703
    %v705 = vand.u32 %v24, 4294901760
    %706 = vmatpush.msra.mxu0 %v705
    %v707 = vand.u32 %v23, 4294901760
    %708 = vmatpush.msra.mxu0 %v707
    %v709 = vand.u32 %v22, 4294901760
    %710 = vmatpush.msra.mxu0 %v709
    %v711 = vand.u32 %v21, 4294901760
    %712 = vmatpush.msra.mxu0 %v711
    %v713 = vand.u32 %v20, 4294901760
    %714 = vmatpush.msra.mxu0 %v713
    %v715 = vand.u32 %v378, 4294901760
    %716 = vmatmul.f32.gmra.mxu0 %v715
    %v717 = vpop.f32.mrf.mxu0
    %v718 = vadd.f32 %v681, %v717
    %719 = vdwg.mxu0
    %v720 = vmul.f32 %v376, 0.03125
    %v721 = vmul.f32 %v718, 0.03125
    %v722 = vmul.f32 %v720, %v720
    %v723 = vsub.f32 %v721, %v722
    %v724 = vmax.f32 %v723, 0.0
    %v725 = vadd.f32 %v724, 1e-05
    %v726 = vrsqrt.pop %v725
    %v727 = vmul.f32 %v726, %v725
    %v728 = vmul.f32 %v727, %v726
    %v729 = vmul.f32 0.5, %v728
    %v730 = vsub.f32 1.5, %v729
    %v731 = vmul.f32 %v726, %v730
    %vm732 = vweird.f32 %v725
    %vm733 = vweird.f32 %v726
    %vm734 = vmor %vm732, %vm733
    %v735 = vsel %vm734, %v726, %v731
    %vm736 = vcmask 31744
    %v738 = vsel %vm736, %v735, 0
    %vm740 = vcmask 1043456
    %v742 = vsel %vm740, %v36, 0
    %744 = vmatpush.msra.mxu0 0.0
    %745 = vmatpush.msra.mxu0 0.0
    %746 = vmatpush.msra.mxu0 0.0
    %747 = vmatpush.msra.mxu0 0.0
    %748 = vmatpush.msra.mxu0 0.0
    %749 = vmatpush.msra.mxu0 0.0
    %750 = vmatpush.msra.mxu0 0.0
    %751 = vmatpush.msra.mxu0 0.0
    %752 = vmatpush.msra.mxu0 0.0
    %753 = vmatpush.msra.mxu0 0.0
    %754 = vmatpush.msra.mxu0 0.0
    %755 = vmatpush.msra.mxu0 0.0
    %756 = vmatpush.msra.mxu0 0.0
    %757 = vmatpush.msra.mxu0 0.0
    %758 = vmatpush.msra.mxu0 0.0
    %v759 = vand.u32 %v742, 4294901760
    %760 = vmatpush.msra.mxu0 %v759
    %v761 = vand.u32 %v738, 4294901760
    %v762 = vsub.f32 %v738, %v761
    %v763 = vand.u32 %v762, 4294901760
    %v764 = vsub.f32 %v762, %v763
    %v765 = vand.u32 %v764, 4294901760
    %766 = vmatmul.f32.gmra.mxu0 %v765
    %v767 = vpop.f32.mrf.mxu0
    %v768 = vadd.f32 0.0, %v767
    %769 = vdwg.mxu0
    %770 = vmatpush.msra.mxu0 0.0
    %771 = vmatpush.msra.mxu0 0.0
    %772 = vmatpush.msra.mxu0 0.0
    %773 = vmatpush.msra.mxu0 0.0
    %774 = vmatpush.msra.mxu0 0.0
    %775 = vmatpush.msra.mxu0 0.0
    %776 = vmatpush.msra.mxu0 0.0
    %777 = vmatpush.msra.mxu0 0.0
    %778 = vmatpush.msra.mxu0 0.0
    %779 = vmatpush.msra.mxu0 0.0
    %780 = vmatpush.msra.mxu0 0.0
    %781 = vmatpush.msra.mxu0 0.0
    %782 = vmatpush.msra.mxu0 0.0
    %783 = vmatpush.msra.mxu0 0.0
    %784 = vmatpush.msra.mxu0 0.0
    %v785 = vand.u32 %v742, 4294901760
    %v786 = vsub.f32 %v742, %v785
    %v787 = vand.u32 %v786, 4294901760
    %v788 = vsub.f32 %v786, %v787
    %v789 = vand.u32 %v788, 4294901760
    %790 = vmatpush.msra.mxu0 %v789
    %v791 = vand.u32 %v738, 4294901760
    %792 = vmatmul.f32.gmra.mxu0 %v791
    %v793 = vpop.f32.mrf.mxu0
    %v794 = vadd.f32 %v768, %v793
    %795 = vdwg.mxu0
    %796 = vmatpush.msra.mxu0 0.0
    %797 = vmatpush.msra.mxu0 0.0
    %798 = vmatpush.msra.mxu0 0.0
    %799 = vmatpush.msra.mxu0 0.0
    %800 = vmatpush.msra.mxu0 0.0
    %801 = vmatpush.msra.mxu0 0.0
    %802 = vmatpush.msra.mxu0 0.0
    %803 = vmatpush.msra.mxu0 0.0
    %804 = vmatpush.msra.mxu0 0.0
    %805 = vmatpush.msra.mxu0 0.0
    %806 = vmatpush.msra.mxu0 0.0
    %807 = vmatpush.msra.mxu0 0.0
    %808 = vmatpush.msra.mxu0 0.0
    %809 = vmatpush.msra.mxu0 0.0
    %810 = vmatpush.msra.mxu0 0.0
    %v811 = vand.u32 %v742, 4294901760
    %v812 = vsub.f32 %v742, %v811
    %813 = vmatpush.msra.mxu0 %v812
    %v814 = vand.u32 %v738, 4294901760
    %v815 = vsub.f32 %v738, %v814
    %816 = vmatmul.f32.gmra.mxu0 %v815
    %v817 = vpop.f32.mrf.mxu0
    %v818 = vadd.f32 %v794, %v817
    %819 = vdwg.mxu0
    %820 = vmatpush.msra.mxu0 0.0
    %821 = vmatpush.msra.mxu0 0.0
    %822 = vmatpush.msra.mxu0 0.0
    %823 = vmatpush.msra.mxu0 0.0
    %824 = vmatpush.msra.mxu0 0.0
    %825 = vmatpush.msra.mxu0 0.0
    %826 = vmatpush.msra.mxu0 0.0
    %827 = vmatpush.msra.mxu0 0.0
    %828 = vmatpush.msra.mxu0 0.0
    %829 = vmatpush.msra.mxu0 0.0
    %830 = vmatpush.msra.mxu0 0.0
    %831 = vmatpush.msra.mxu0 0.0
    %832 = vmatpush.msra.mxu0 0.0
    %833 = vmatpush.msra.mxu0 0.0
    %834 = vmatpush.msra.mxu0 0.0
    %v835 = vand.u32 %v742, 4294901760
    %836 = vmatpush.msra.mxu0 %v835
    %v837 = vand.u32 %v738, 4294901760
    %v838 = vsub.f32 %v738, %v837
    %v839 = vand.u32 %v838, 4294901760
    %840 = vmatmul.f32.gmra.mxu0 %v839
    %v841 = vpop.f32.mrf.mxu0
    %v842 = vadd.f32 %v818, %v841
    %843 = vdwg.mxu0
    %844 = vmatpush.msra.mxu0 0.0
    %845 = vmatpush.msra.mxu0 0.0
    %846 = vmatpush.msra.mxu0 0.0
    %847 = vmatpush.msra.mxu0 0.0
    %848 = vmatpush.msra.mxu0 0.0
    %849 = vmatpush.msra.mxu0 0.0
    %850 = vmatpush.msra.mxu0 0.0
    %851 = vmatpush.msra.mxu0 0.0
    %852 = vmatpush.msra.mxu0 0.0
    %853 = vmatpush.msra.mxu0 0.0
    %854 = vmatpush.msra.mxu0 0.0
    %855 = vmatpush.msra.mxu0 0.0
    %856 = vmatpush.msra.mxu0 0.0
    %857 = vmatpush.msra.mxu0 0.0
    %858 = vmatpush.msra.mxu0 0.0
    %v859 = vand.u32 %v742, 4294901760
    %v860 = vsub.f32 %v742, %v859
    %v861 = vand.u32 %v860, 4294901760
    %862 = vmatpush.msra.mxu0 %v861
    %v863 = vand.u32 %v738, 4294901760
    %864 = vmatmul.f32.gmra.mxu0 %v863
    %v865 = vpop.f32.mrf.mxu0
    %v866 = vadd.f32 %v842, %v865
    %867 = vdwg.mxu0
    %868 = vmatpush.msra.mxu0 0.0
    %869 = vmatpush.msra.mxu0 0.0
    %870 = vmatpush.msra.mxu0 0.0
    %871 = vmatpush.msra.mxu0 0.0
    %872 = vmatpush.msra.mxu0 0.0
    %873 = vmatpush.msra.mxu0 0.0
    %874 = vmatpush.msra.mxu0 0.0
    %875 = vmatpush.msra.mxu0 0.0
    %876 = vmatpush.msra.mxu0 0.0
    %877 = vmatpush.msra.mxu0 0.0
    %878 = vmatpush.msra.mxu0 0.0
    %879 = vmatpush.msra.mxu0 0.0
    %880 = vmatpush.msra.mxu0 0.0
    %881 = vmatpush.msra.mxu0 0.0
    %882 = vmatpush.msra.mxu0 0.0
    %v883 = vand.u32 %v742, 4294901760
    %884 = vmatpush.msra.mxu0 %v883
    %v885 = vand.u32 %v738, 4294901760
    %886 = vmatmul.f32.gmra.mxu0 %v885
    %v887 = vpop.f32.mrf.mxu0
    %v888 = vadd.f32 %v866, %v887
    %889 = vdwg.mxu0
    %v890 = vmul.f32 %v18, %v888
    %v892 = vperm.slane %v19, 0
    %v894 = vmul.f32 %v890, %v892
    %895 = vst [vmem:[#allocation2] sm:$0xf] %v894
    // Predicated region
    $region18: #{tpu_custom_call.1} parent=1 // pred_check
      _
    $region19: #{tpu_custom_call.1} parent=1 // pred_check_branch
      %897 = sbr.rel (0) target = $region21
    $region20: #{tpu_custom_call.1} parent=1 // pred_region
      %899 = vsyncadd [#allocation3], 0
      %s901 = sshll.u32 [#allocation2], 4
      %s902 = int_to_ptr.vmem [resolvable:$true] %s901
      %s903 = sshll.u32 %s4, 4
      %s904 = int_to_ptr.hbm [resolvable:$true] %s903
      %906 = dma.vmem_to_hbm [thread:$0]  %s902, 64, %s904, [#allocation3]
    $region21: #{tpu_custom_call.1} parent=1 // pred_fallthru
      _
    // Predicated region
    $region22: #{tpu_custom_call.1} parent=1 // pred_check
      _
    $region23: #{tpu_custom_call.1} parent=1 // pred_check_branch
      %908 = sbr.rel (0) target = $region25
    $region24: #{tpu_custom_call.1} parent=1 // pred_region
      %910 = dma.done [#allocation3], 64
    $region25: #{tpu_custom_call.1} parent=1 // pred_fallthru
      _
    %911 = vsyncpa [#allocation3], 1

</llo_original>
